<compile_context>
chip_gen: v7x
topology: tpu7x:2x2x1
jax: 0.10.0
libtpu: 0.0.40
codegen_flags: <defaults>
</compile_context>

<pallas_src>
import jax
import jax.numpy as jnp
from jax.experimental import pallas as pl
from jax.experimental.pallas import tpu as pltpu


# VMEM accounting knobs (conservative): double-buffered native-dtype input
# block + ~4 block-sized float32 temporaries, using ~70% of the scoped limit
# to leave headroom for the (tiny) output/alpha buffers and compiler scratch.
_F32_TEMP_COPIES = 4
_VMEM_USE_FRACTION = 0.70


def _pick_vmem_limit():
    """Per-generation scoped-VMEM limit (bytes)."""
    vmem_limit = 48 * 1024 * 1024  # safe on every generation (v7x has 64 MiB phys)
    try:
        info = pltpu.get_tpu_info()
        phys = getattr(info, "vmem_capacity_bytes", None)
        if phys is not None:
            if phys <= 64 * 1024 * 1024:
                vmem_limit = 48 * 1024 * 1024   # v7x-class: 64 MiB physical
            else:
                vmem_limit = 64 * 1024 * 1024   # v5e / v6e: 128 MiB physical
    except Exception:
        pass
    return vmem_limit


def _block_elems_budget(dtype, vmem_limit_bytes):
    """Max elements per input block given VMEM limit and input dtype."""
    itemsize = jnp.dtype(dtype).itemsize
    per_elem_bytes = 2 * itemsize + _F32_TEMP_COPIES * 4
    usable = int(vmem_limit_bytes * _VMEM_USE_FRACTION)
    return max(usable // per_elem_bytes, 8 * 128)


def _choose_tiles(B, C, S, max_block_elems):
    """Pick (Bt, Ct, St) that divide (B, C, S) exactly (no remainder blocks).

    Ct is a multiple of 128 (lane-dense output stores) or full C; Bt a multiple
    of 8 or full B; St a multiple of 128 or full S. Prefers keeping the
    reduction (seq) axis whole; tiles it only when the budget forces it.
    """
    bt_cands = sorted({b for b in range(8, B + 1, 8) if B % b == 0} | {B})
    if C % 128 == 0:
        ct_cands = sorted({c for c in range(128, C + 1, 128) if C % c == 0} | {C})
    else:
        ct_cands = [C]
    st_cands = sorted({s for s in range(128, S + 1, 128) if S % s == 0} | {S})

    # Pass 1: reduction axis whole (single-pass kernel, no scratch).
    best = None
    for bt in bt_cands:
        for ct in ct_cands:
            elems = bt * ct * S
            if elems <= max_block_elems:
                key = (elems, bt)  # biggest block; tie-break: more channel-grid granularity
                if best is None or key > best[0]:
                    best = (key, (bt, ct, S))
    if best is not None:
        bt, ct, st = best[1]
        # Whole array in one block -> split a parallel axis so the pipeline
        # (and megacore on multi-TC parts) has at least 2 grid steps.
        if bt == B and ct == C:
            smaller_bt = [b for b in bt_cands if b < B]
            smaller_ct = [c for c in ct_cands if c < C]
            if smaller_bt:
                bt = smaller_bt[-1]
            elif smaller_ct:
                ct = smaller_ct[-1]
        return bt, ct, st

    # Pass 2: also tile the reduction axis (online-softmax kernel).
    for bt in bt_cands:
        for ct in ct_cands:
            for st in st_cands:
                elems = bt * ct * st
                if elems <= max_block_elems:
                    key = (elems, st)  # biggest block; tie-break: fewer reduction steps
                    if best is None or key > best[0]:
                        best = (key, (bt, ct, st))
    if best is not None:
        return best[1]

    # Nothing meets the soft budget: smallest legal block (still exact divisors).
    return bt_cands[0], ct_cands[0], st_cands[0]


def _pooling_kernel_full_s(x_ref, alpha_ref, o_ref):
    # x_ref:     (Bt, Ct, S)  native dtype
    # alpha_ref: (1,  Ct, 1)  native dtype
    # o_ref:     (Bt, Ct)
    x = x_ref[...].astype(jnp.float32)
    a = alpha_ref[...].astype(jnp.float32)        # broadcasts over batch & seq
    z = a * x
    # Stable softmax-weighted sum over the last axis:
    #   sum(softmax(z) * x) == sum(exp(z - max) * x) / sum(exp(z - max))
    m = jnp.max(z, axis=-1, keepdims=True)
    e = jnp.exp(z - m)
    num = jnp.sum(e * x, axis=-1)                 # (Bt, Ct)
    den = jnp.sum(e, axis=-1)                     # (Bt, Ct)
    o_ref[...] = (num / den).astype(o_ref.dtype)


def _pooling_kernel_tiled_s(x_ref, alpha_ref, o_ref, m_ref, l_ref, acc_ref):
    # Online-softmax (flash-style) accumulation over the seq grid axis.
    # x_ref: (Bt, Ct, St); scratch m/l/acc: (Bt, Ct, 1) f32; o_ref: (Bt, Ct).
    k = pl.program_id(2)

    @pl.when(k == 0)
    def _init():
        m_ref[...] = jnp.full_like(m_ref, -jnp.inf)
        l_ref[...] = jnp.zeros_like(l_ref)
        acc_ref[...] = jnp.zeros_like(acc_ref)

    x = x_ref[...].astype(jnp.float32)
    a = alpha_ref[...].astype(jnp.float32)
    z = a * x
    m_prev = m_ref[...]
    m_new = jnp.maximum(m_prev, jnp.max(z, axis=-1, keepdims=True))
    corr = jnp.exp(m_prev - m_new)                # exp(-inf) == 0 on first step
    e = jnp.exp(z - m_new)
    l_ref[...] = corr * l_ref[...] + jnp.sum(e, axis=-1, keepdims=True)
    acc_ref[...] = corr * acc_ref[...] + jnp.sum(e * x, axis=-1, keepdims=True)
    m_ref[...] = m_new

    @pl.when(k == pl.num_programs(2) - 1)
    def _finalize():
        res = acc_ref[...] / l_ref[...]           # (Bt, Ct, 1)
        o_ref[...] = res[:, :, 0].astype(o_ref.dtype)


def trainable_pooling(x, alpha, *, max_block_elems=None):
    """x: (B, C, S), alpha: (1, C) -> (B, C). Matches TrainablePooling.forward."""
    B, C, S = x.shape
    alpha3 = alpha.reshape(1, C, 1)

    vmem_limit = _pick_vmem_limit()
    budget = (max_block_elems if max_block_elems is not None
              else _block_elems_budget(x.dtype, vmem_limit))
    Bt, Ct, St = _choose_tiles(B, C, S, budget)
    nb, nc, ns = B // Bt, C // Ct, S // St   # exact divisors by construction

    if ns == 1:
        grid = (nc, nb)                       # channels outermost: alpha block stays resident
        kernel = _pooling_kernel_full_s
        in_specs = [
            pl.BlockSpec((Bt, Ct, S), lambda c, b: (b, c, 0)),
            pl.BlockSpec((1, Ct, 1), lambda c, b: (0, c, 0)),
        ]
        out_specs = pl.BlockSpec((Bt, Ct), lambda c, b: (b, c))
        scratch = []
        dim_sem = ("parallel", "parallel")
    else:
        grid = (nc, nb, ns)                   # reduction axis innermost ("arbitrary")
        kernel = _pooling_kernel_tiled_s
        in_specs = [
            pl.BlockSpec((Bt, Ct, St), lambda c, b, k: (b, c, k)),
            pl.BlockSpec((1, Ct, 1), lambda c, b, k: (0, c, 0)),
        ]
        out_specs = pl.BlockSpec((Bt, Ct), lambda c, b, k: (b, c))
        scratch = [pltpu.VMEM((Bt, Ct, 1), jnp.float32)] * 3
        dim_sem = ("parallel", "parallel", "arbitrary")

    return pl.pallas_call(
        kernel,
        out_shape=jax.ShapeDtypeStruct((B, C), x.dtype),
        grid_spec=pltpu.PrefetchScalarGridSpec(
            num_scalar_prefetch=0,
            grid=grid,
            in_specs=in_specs,
            out_specs=out_specs,
            scratch_shapes=scratch,
        ),
        compiler_params=pltpu.CompilerParams(
            dimension_semantics=dim_sem,
            vmem_limit_bytes=vmem_limit,
        ),
    )(x, alpha3)


def _reference(x, alpha):
    # pure-JAX mirror of the PyTorch forward
    B, C, S = x.shape
    xf = x.astype(jnp.float32)
    A = jnp.broadcast_to(alpha.reshape(1, C, 1).astype(jnp.float32), (1, C, S))
    W = jax.nn.softmax(A * xf, axis=-1)
    return jnp.sum(W * xf, axis=-1).astype(x.dtype)


if __name__ == "__main__":
    key = jax.random.PRNGKey(0)
    k1, k2, k3 = jax.random.split(key, 3)

    # 1) Small shape consistent with the module.
    batch, channels, seq_len = 2, 8, 16
    x = jax.random.normal(k1, (batch, channels, seq_len), dtype=jnp.float32)
    alpha = jnp.full((1, channels), 2.0, dtype=jnp.float32)  # nn.Parameter(full((1,C), 2.0))
    out = jax.block_until_ready(trainable_pooling(x, alpha))
    ref = _reference(x, alpha)
    assert out.shape == (batch, channels)
    assert jnp.allclose(out, ref, atol=1e-5, rtol=1e-5), "mismatch vs reference (small)"

    # 2) Gridded full-seq path: batch/channel tiling, resident alpha block,
    #    forced >=2 grid steps along a parallel axis.
    B2, C2, S2 = 16, 256, 128
    x2 = jax.random.normal(k2, (B2, C2, S2), dtype=jnp.float32)
    alpha2 = jnp.full((1, C2), 2.0, dtype=jnp.float32)
    out2 = jax.block_until_ready(trainable_pooling(x2, alpha2))
    ref2 = _reference(x2, alpha2)
    assert out2.shape == (B2, C2)
    assert jnp.allclose(out2, ref2, atol=1e-4, rtol=1e-4), "mismatch vs reference (gridded)"

    # 3) Force the seq-tiled online-softmax fallback path with a tiny budget.
    B3, C3, S3 = 4, 8, 256
    x3 = jax.random.normal(k3, (B3, C3, S3), dtype=jnp.float32)
    alpha3 = jnp.full((1, C3), 2.0, dtype=jnp.float32)
    out3 = jax.block_until_ready(
        trainable_pooling(x3, alpha3, max_block_elems=4096))   # -> St=128, 2 seq steps
    ref3 = _reference(x3, alpha3)
    assert out3.shape == (B3, C3)
    assert jnp.allclose(out3, ref3, atol=1e-4, rtol=1e-4), "mismatch vs reference (seq-tiled)"

    print("KERNEL_OK")
</pallas_src>

<mosaic_0001>
module attributes {stable_mosaic.version = 11 : i64} {
  func.func @_pooling_kernel_full_s(%arg0: i32, %arg1: i32, %arg2: memref<2x8x16xf32, #tpu.memory_space<vmem>>, %arg3: memref<1x8x1xf32, #tpu.memory_space<vmem>>, %arg4: memref<2x8xf32, #tpu.memory_space<vmem>>) attributes {dimension_semantics = [#tpu.dimension_semantics<parallel>, #tpu.dimension_semantics<parallel>], iteration_bounds = array<i64: 1, 1>, scalar_prefetch = 0 : i64, scratch_operands = 0 : i64, tpu.core_type = #tpu.core_type<tc>, window_params = [{transform_indices = @transform_0, window_bounds = array<i64: 2, 8, 16>}, {transform_indices = @transform_1, window_bounds = array<i64: 1, 8, 1>}, {transform_indices = @transform_2, window_bounds = array<i64: 2, 8>}]} {
    %c0 = arith.constant 0 : index
    %c0_0 = arith.constant 0 : index
    %c0_1 = arith.constant 0 : index
    %0 = vector.load %arg2[%c0, %c0_0, %c0_1] : memref<2x8x16xf32, #tpu.memory_space<vmem>>, vector<2x8x16xf32>
    %c0_2 = arith.constant 0 : index
    %c0_3 = arith.constant 0 : index
    %c0_4 = arith.constant 0 : index
    %1 = vector.load %arg3[%c0_2, %c0_3, %c0_4] : memref<1x8x1xf32, #tpu.memory_space<vmem>>, vector<1x8x1xf32>
    %2 = vector.broadcast %1 : vector<1x8x1xf32> to vector<2x8x16xf32>
    %3 = arith.mulf %2, %0 : vector<2x8x16xf32>
    %cst = arith.constant dense<0xFF800000> : vector<2x8xf32>
    %4 = vector.multi_reduction <maximumf>, %3, %cst [2] : vector<2x8x16xf32> to vector<2x8xf32>
    %5 = vector.shape_cast %4 : vector<2x8xf32> to vector<2x8x1xf32>
    %6 = vector.broadcast %5 : vector<2x8x1xf32> to vector<2x8x16xf32>
    %7 = arith.subf %3, %6 : vector<2x8x16xf32>
    %8 = math.exp %7 : vector<2x8x16xf32>
    %9 = arith.mulf %8, %0 : vector<2x8x16xf32>
    %cst_5 = arith.constant dense<0.000000e+00> : vector<2x8xf32>
    %10 = vector.multi_reduction <add>, %9, %cst_5 [2] : vector<2x8x16xf32> to vector<2x8xf32>
    %cst_6 = arith.constant dense<0.000000e+00> : vector<2x8xf32>
    %11 = vector.multi_reduction <add>, %8, %cst_6 [2] : vector<2x8x16xf32> to vector<2x8xf32>
    %12 = arith.divf %10, %11 : vector<2x8xf32>
    %c0_7 = arith.constant 0 : index
    %c0_8 = arith.constant 0 : index
    %13 = vector.load %arg4[%c0_7, %c0_8] : memref<2x8xf32, #tpu.memory_space<vmem>>, vector<2x8xf32>
    tpu.vector_store %arg4[%c0_7, %c0_8], %12 {strides = array<i32>} : memref<2x8xf32, #tpu.memory_space<vmem>>, vector<2x8xf32>,
    return
  }
  func.func @transform_0(%arg0: i32, %arg1: i32) -> (i32, i32, i32) {
    %c0_i32 = arith.constant 0 : i32
    %c0_i32_0 = arith.constant 0 : i32
    return %arg1, %arg0, %c0_i32 : i32, i32, i32
  }
  func.func @transform_1(%arg0: i32, %arg1: i32) -> (i32, i32, i32) {
    %c0_i32 = arith.constant 0 : i32
    %c0_i32_0 = arith.constant 0 : i32
    %c0_i32_1 = arith.constant 0 : i32
    return %c0_i32, %arg0, %c0_i32_0 : i32, i32, i32
  }
  func.func @transform_2(%arg0: i32, %arg1: i32) -> (i32, i32) {
    %c0_i32 = arith.constant 0 : i32
    return %arg1, %arg0 : i32, i32
  }
}

</mosaic_0001>

<llo_original>
// kernel: tpu_custom_call.1
$region0: #{tpu_custom_call.1}
  #allocation0 [shape = 'u32[]', space=smem, size = 0x4, offset = 0x4, fixed_abs, tag = 'smem constant byte address 0x4 - core index']
  #allocation1 [shape = 'u32[144,128]{1,0:T(1,128)}', space=vmem, size = 0x12000, scoped, tag = 'internal scratch']
  %s0 = inlined_call_operand.hbm [shape: f32[2,8,16], index: 0, kind: input, shape index: {}]
  %s1 = inlined_call_operand.vmem [shape: f32[1,8,1], index: 1, kind: input, shape index: {}]
  %s2 = inlined_call_operand.hbm [shape: f32[2,8], index: 2, kind: output, shape index: {}]
  %s3 = sld [smem:[#allocation0]]
  $region22: #{tpu_custom_call.1} parent=0
    _
  %s5 = ssub.s32 1, %s3
  %s6 = scalar_select 0, %s5, %s3
  $region1: #{tpu_custom_call.1} parent=0
    #allocation2 [shape = 'u8[8192]{0}', space=vmem, size = 0x2000, scoped, tag = 'input window, operand 0, single buffered']
    #allocation3 [shape = 's32[1]{0}', space=sflag, size = 0x4, scoped, tag = 'scoped memory for tpu_custom_call.1']
    #allocation4 [shape = 's32[1]{0}', space=sflag, size = 0x4, scoped, tag = 'scoped memory for tpu_custom_call.1']
    #allocation5 [shape = 'u8[1024]{0}', space=vmem, size = 0x400, scoped, tag = 'output window, operand 0, single buffered']
    %7 = vsyncpa [#allocation3], 0
    %8 = vsyncpa [#allocation4], 0
    // Predicated region
    $region2: #{tpu_custom_call.1} parent=1 // pred_check
      _
    $region3: #{tpu_custom_call.1} parent=1 // pred_check_branch
      %10 = sbr.rel (0) target = $region5
    $region4: #{tpu_custom_call.1} parent=1 // pred_region
      %s12 = ssub.s32 256, 256
      %13 = vsyncadd [#allocation3], %s12
      %s14 = sshll.u32 [#allocation2], 4
      %s15 = int_to_ptr.vmem [resolvable:$true] %s14
      %20 = dma.hbm_to_vmem [thread:$0]  %s0, 256, %s15, [#allocation3], 128, 128, 8
    $region5: #{tpu_custom_call.1} parent=1 // pred_fallthru
      _
    // Predicated region
    $region6: #{tpu_custom_call.1} parent=1 // pred_check
      _
    $region7: #{tpu_custom_call.1} parent=1 // pred_check_branch
      %22 = sbr.rel (0) target = $region9
    $region8: #{tpu_custom_call.1} parent=1 // pred_region
      _
    $region9: #{tpu_custom_call.1} parent=1 // pred_fallthru
      _
    // Predicated region
    $region10: #{tpu_custom_call.1} parent=1 // pred_check
      _
    $region11: #{tpu_custom_call.1} parent=1 // pred_check_branch
      %24 = sbr.rel (0) target = $region13
    $region12: #{tpu_custom_call.1} parent=1 // pred_region
      %25 = dma.done [#allocation3], 256
    $region13: #{tpu_custom_call.1} parent=1 // pred_fallthru
      _
    %v26 = vld [vmem:[#allocation2] sm:$0xff]
    %v27 = vld [vmem:[#allocation2 + $0x8] sm:$0xff]
    %v28 = vld [vmem:[%s1] sm:$0xff]
    %30 = vset.pattern.permute.xlu0 0
    %31 = vperm.xlu0 %30, %v28
    %v32 = vpop.permute.xlu0 %31
    %v34 = vmul.f32 %v32, %v26
    %v35 = vmul.f32 %v32, %v27
    %vm36 = vcmask 130048
    %v37 = vsel %vm36, %v34, -inf
    %38 = vmax.xlane.f32.xlu0 %v37
    %v39 = vpop.xlane.xlu0 %38
    %v40 = vsel %vm36, %v35, -inf
    %41 = vmax.xlane.f32.xlu0 %v40
    %v42 = vpop.xlane.xlu0 %41
    %v43 = vsub.f32 %v34, %v39
    %v44 = vsub.f32 %v35, %v42
    %v45 = vmul.f32 %v43, 1.442695
    %v46 = vpow.pop %v45
    %v47 = vmul.f32 %v44, 1.442695
    %v48 = vpow.pop %v47
    %v49 = vmul.f32 %v46, %v26
    %v50 = vmul.f32 %v48, %v27
    %v51 = vsel %vm36, %v49, 0.0
    %52 = vadd.xlane.f32.xlu0 %v51
    %v53 = vpop.xlane.xlu0 %52
    %v54 = vsel %vm36, %v50, 0.0
    %55 = vadd.xlane.f32.xlu0 %v54
    %v56 = vpop.xlane.xlu0 %55
    %v57 = vsel %vm36, %v46, 0.0
    %58 = vadd.xlane.f32.xlu0 %v57
    %v59 = vpop.xlane.xlu0 %58
    %v60 = vsel %vm36, %v48, 0.0
    %61 = vadd.xlane.f32.xlu0 %v60
    %v62 = vpop.xlane.xlu0 %61
    %v63 = vrcp.pop %v59
    %v64 = vmul.f32 %v53, %v63
    %v65 = vrcp.pop %v62
    %v66 = vmul.f32 %v56, %v65
    %v69 = vlaneseq
    %v70 = vand.u32 %v69, 127
    %v71 = vlaneseq
    %v72 = vshrl.u32 %v71, 7
    %v73 = vsub.s32 %v70, %v72
    %v74 = vrot.slane %v64, %v73
    %v75 = vlaneseq
    %v76 = vshrl.u32 %v75, 7
    %v77 = vsub.s32 %v70, %v76
    %v78 = vrot.slane %v66, %v77
    %vm79 = vcmask 1041409
    %v80 = vsel %vm79, %v78, %v74
    %vm82 = vcmask 58368
    %83 = vst.msk [vmem:[#allocation5] sm:$0x3] %vm82, %v80
    // Predicated region
    $region14: #{tpu_custom_call.1} parent=1 // pred_check
      _
    $region15: #{tpu_custom_call.1} parent=1 // pred_check_branch
      %85 = sbr.rel (0) target = $region17
    $region16: #{tpu_custom_call.1} parent=1 // pred_region
      %s87 = ssub.s32 32, 32
      %88 = vsyncadd [#allocation4], %s87
      %s90 = sshll.u32 [#allocation5], 4
      %s91 = int_to_ptr.vmem [resolvable:$true] %s90
      %93 = dma.vmem_to_hbm [thread:$0]  %s91, 32, %s2, [#allocation4]
    $region17: #{tpu_custom_call.1} parent=1 // pred_fallthru
      _
    // Predicated region
    $region18: #{tpu_custom_call.1} parent=1 // pred_check
      _
    $region19: #{tpu_custom_call.1} parent=1 // pred_check_branch
      %95 = sbr.rel (0) target = $region21
    $region20: #{tpu_custom_call.1} parent=1 // pred_region
      %96 = dma.done [#allocation4], 32
    $region21: #{tpu_custom_call.1} parent=1 // pred_fallthru
      _
    %97 = vsyncpa [#allocation3], 1
    %98 = vsyncpa [#allocation4], 1

</llo_original>
